<compile_context>
chip_gen: v5e
topology: v5e:2x2
jax: 0.10.0
libtpu: 0.0.40
codegen_flags: <defaults>
</compile_context>

<pallas_src>
import jax
import jax.numpy as jnp
from jax.experimental import pallas as pl
from jax.experimental.pallas import tpu as pltpu

Q = 4.0
PI = jnp.pi


# --------------------------------------------------------------------------
# Fused MLP kernel (the `Functional` module forward)
# --------------------------------------------------------------------------
def _make_mlp_kernel(d_in, n_hidden):
    """Ref order: xT, w1, b1, wf, bf, [wh, bh], out."""

    def kernel(*refs):
        x_ref, w1_ref, b1_ref, wf_ref, bf_ref = refs[:5]
        if n_hidden > 0:
            wh_ref, bh_ref = refs[5], refs[6]
            out_ref = refs[7]
        else:
            out_ref = refs[5]

        xT = x_ref[...]          # (d_in, tm)  rows live on the lane axis
        w1 = w1_ref[...]         # (h0, d_in)  PyTorch (out, in) layout

        # First layer on the VPU: K = d_in is tiny (2), skip the MXU round trip.
        acc = w1[:, 0:1] * xT[0:1, :]
        for k in range(1, d_in):
            acc = acc + w1[:, k:k + 1] * xT[k:k + 1, :]
        h = jnp.tanh(acc + b1_ref[...])               # (h0, tm), lane dense

        # Hidden layers: (h, h) @ (h, tm) on the MXU, activations stay lane dense.
        for i in range(n_hidden):
            h = jnp.tanh(
                jnp.dot(wh_ref[i], h, preferred_element_type=jnp.float32)
                + bh_ref[i])

        # Final layer (-> 1 output feature): result is already (1, tm) lane dense.
        out = jnp.tanh(
            jnp.dot(wf_ref[...], h, preferred_element_type=jnp.float32)
            + bf_ref[...])
        out_ref[...] = out[None]                      # (1, 1, tm)

    return kernel


def _round_up(n, m):
    return ((n + m - 1) // m) * m


def functional_forward(x, params, *, tm=256):
    """Pallas forward of the `Functional` PINN MLP.

    params (PyTorch nn.Linear native (out, in) layout):
      w1 (h0, d_in), b1 (h0, 1), wh (n_hidden, h, h) or None,
      bh (n_hidden, h, 1) or None, wf (1, h_last), bf (1, 1).
    Returns float32 of shape (batch,) — the torch.squeeze of the (batch, 1) output.
    """
    batch, d_in = x.shape
    # Rows sit on the lane axis inside the kernel, so the tile must be a
    # multiple of 128.  256 amortizes per-grid-step overhead while the live
    # activation (32, 256) f32 is only 8 dense vregs (no spill pressure).
    tm = max(128, (min(tm, _round_up(batch, 128)) // 128) * 128)
    padded = _round_up(batch, tm)
    grid = padded // tm

    x_pad = jnp.zeros((padded, d_in), jnp.float32).at[:batch].set(x)
    xt = x_pad.T                                     # (d_in, padded)

    n_hidden = 0 if params["wh"] is None else int(params["wh"].shape[0])
    kernel = _make_mlp_kernel(d_in, n_hidden)

    def full(a):
        nd = a.ndim
        return pl.BlockSpec(a.shape, lambda i, _nd=nd: (0,) * _nd)

    in_specs = [pl.BlockSpec((d_in, tm), lambda i: (0, i)),
                full(params["w1"]), full(params["b1"]),
                full(params["wf"]), full(params["bf"])]
    operands = [xt, params["w1"], params["b1"], params["wf"], params["bf"]]
    if n_hidden > 0:
        in_specs += [full(params["wh"]), full(params["bh"])]
        operands += [params["wh"], params["bh"]]

    out = pl.pallas_call(
        kernel,
        out_shape=jax.ShapeDtypeStruct((grid, 1, tm), jnp.float32),
        grid_spec=pltpu.PrefetchScalarGridSpec(
            num_scalar_prefetch=0,
            grid=(grid,),
            in_specs=in_specs,
            out_specs=pl.BlockSpec((1, 1, tm), lambda i: (i, 0, 0)),
        ),
        compiler_params=pltpu.CompilerParams(
            dimension_semantics=("parallel",)),
    )(*operands)

    return out.reshape(padded)[:batch]


# --------------------------------------------------------------------------
# Parameters / pure-JAX reference
# --------------------------------------------------------------------------
def init_params(key, input_size, layer_sizes):
    """Deterministic init matching the `Functional` module shapes (torch layout)."""
    # TODO(synk): non-uniform hidden widths would need per-layer operands
    # instead of the stacked (n_hidden, h, h) weight tensor.
    assert all(s == layer_sizes[0] for s in layer_sizes), "uniform hidden widths required"
    n_hidden = len(layer_sizes) - 1
    keys = jax.random.split(key, 2 * (len(layer_sizes) + 1))
    ki = iter(keys)

    def linear(din, dout):
        w = jax.random.normal(next(ki), (dout, din), jnp.float32) / jnp.sqrt(din)
        b = jax.random.normal(next(ki), (dout, 1), jnp.float32) * 0.01
        return w, b

    w1, b1 = linear(input_size, layer_sizes[0])
    whs, bhs = [], []
    for i in range(n_hidden):
        w, b = linear(layer_sizes[i], layer_sizes[i + 1])
        whs.append(w)
        bhs.append(b)
    wf, bf = linear(layer_sizes[-1], 1)
    wh = jnp.stack(whs) if n_hidden > 0 else None
    bh = jnp.stack(bhs) if n_hidden > 0 else None
    return dict(w1=w1, b1=b1, wh=wh, bh=bh, wf=wf, bf=bf)


def reference_forward(x, params):
    h = jnp.tanh(x @ params["w1"].T + params["b1"].T)
    if params["wh"] is not None:
        for i in range(params["wh"].shape[0]):
            h = jnp.tanh(h @ params["wh"][i].T + params["bh"][i].T)
    out = jnp.tanh(h @ params["wf"].T + params["bf"].T)
    return jnp.squeeze(out, axis=-1)


# --------------------------------------------------------------------------
# pde_function / PINN forward
# --------------------------------------------------------------------------
def _body_force(x, y):
    Fx = (-1.0 * (4 * PI ** 2 * jnp.cos(2 * PI * x) * jnp.sin(PI * y)
                  - Q * y ** 3 * PI * jnp.cos(PI * x))
          - 0.5 * (PI ** 2 * jnp.cos(2 * PI * x) * jnp.sin(PI * y)
                   - Q * y ** 3 * PI * jnp.cos(PI * x))
          - 0.5 * 8 * PI ** 2 * jnp.cos(2 * PI * x) * jnp.sin(PI * y))
    Fy = (1.0 * (3 * Q * y ** 2 * jnp.sin(PI * x)
                 - 2 * PI ** 2 * jnp.cos(PI * y) * jnp.sin(2 * PI * x))
          - 0.5 * (2 * PI ** 2 * jnp.cos(PI * y) * jnp.sin(2 * PI * x)
                   + Q * y ** 4 * PI ** 2 * jnp.sin(PI * x) / 4)
          + 0.5 * 6 * Q * y ** 2 * jnp.sin(PI * x))
    return Fx, Fy


def _mlp_scalar(params, xi, yi):
    inp = jnp.stack([xi, yi])[None, :]
    return reference_forward(inp, params)[0]


def pde_residuals(x, y, params_u, params_v, mu, lmbd):
    """Lx, Ly of pde_function via nested JAX autodiff."""
    # TODO(synk): jax.grad cannot flow through pallas_call without a custom VJP,
    # so the derivative path uses the numerically identical pure-JAX forward.
    C11 = 2 * mu + lmbd
    C12 = lmbd
    C33 = 2 * mu
    u = lambda xi, yi: _mlp_scalar(params_u, xi, yi)
    v = lambda xi, yi: _mlp_scalar(params_v, xi, yi)

    def sxx(xi, yi):
        return jax.grad(u, 0)(xi, yi) * C11 + jax.grad(v, 1)(xi, yi) * C12

    def syy(xi, yi):
        return jax.grad(v, 1)(xi, yi) * C11 + jax.grad(u, 0)(xi, yi) * C12

    def sxy(xi, yi):
        exy = jax.grad(u, 1)(xi, yi) + 0.5 * jax.grad(v, 0)(xi, yi)
        return exy * C33

    def residual(xi, yi):
        fx, fy = _body_force(xi, yi)
        lx = jax.grad(sxx, 0)(xi, yi) + jax.grad(sxy, 1)(xi, yi) - fx
        ly = jax.grad(sxy, 0)(xi, yi) + jax.grad(syy, 1)(xi, yi) - fy
        return lx, ly

    return jax.vmap(residual)(x, y)


def pinn_forward(x, y, params_u, params_v, mu, lmbd):
    """Matches PINN.forward: returns (Lx, Ly, Uxy, Vxy)."""
    xy = jnp.stack([x, y], axis=1)
    uxy = functional_forward(xy, params_u)   # Pallas kernel
    vxy = functional_forward(xy, params_v)   # Pallas kernel
    lx, ly = jax.jit(pde_residuals)(x, y, params_u, params_v, mu, lmbd)
    return lx, ly, uxy, vxy


# --------------------------------------------------------------------------
if __name__ == "__main__":
    input_size = 2
    uxy_sizes = [32, 32, 32]
    vxy_sizes = [32, 32, 32]
    batch = 300      # non-multiple of the tile -> exercises the padding path; grid = 2

    key = jax.random.PRNGKey(0)
    ku, kv, kx, ky, km, kl = jax.random.split(key, 6)
    params_u = init_params(ku, input_size, uxy_sizes)
    params_v = init_params(kv, input_size, vxy_sizes)
    mu = jax.random.normal(km, (), jnp.float32) + 1.0
    lmbd = jax.random.normal(kl, (), jnp.float32) + 1.0

    x = jax.random.uniform(kx, (batch,), jnp.float32)
    y = jax.random.uniform(ky, (batch,), jnp.float32)

    lx, ly, uxy, vxy = jax.block_until_ready(
        pinn_forward(x, y, params_u, params_v, mu, lmbd))

    # Check the Pallas MLP forward against the pure-JAX reference.
    xy = jnp.stack([x, y], axis=1)
    ref_u = reference_forward(xy, params_u)
    ref_v = reference_forward(xy, params_v)
    assert uxy.shape == (batch,) and vxy.shape == (batch,)
    assert lx.shape == (batch,) and ly.shape == (batch,)
    assert jnp.allclose(uxy, ref_u, atol=1e-4, rtol=1e-4)
    assert jnp.allclose(vxy, ref_v, atol=1e-4, rtol=1e-4)
    assert bool(jnp.all(jnp.isfinite(lx))) and bool(jnp.all(jnp.isfinite(ly)))
    print("KERNEL_OK")
</pallas_src>

<mosaic_0001>
module attributes {stable_mosaic.version = 11 : i64} {
  func.func @kernel(%arg0: i32, %arg1: memref<2x256xf32, #tpu.memory_space<vmem>>, %arg2: memref<32x2xf32, #tpu.memory_space<vmem>>, %arg3: memref<32x1xf32, #tpu.memory_space<vmem>>, %arg4: memref<1x32xf32, #tpu.memory_space<vmem>>, %arg5: memref<1x1xf32, #tpu.memory_space<vmem>>, %arg6: memref<2x32x32xf32, #tpu.memory_space<vmem>>, %arg7: memref<2x32x1xf32, #tpu.memory_space<vmem>>, %arg8: memref<1x1x256xf32, #tpu.memory_space<vmem>>) attributes {dimension_semantics = [#tpu.dimension_semantics<parallel>], iteration_bounds = array<i64: 2>, scalar_prefetch = 0 : i64, scratch_operands = 0 : i64, tpu.core_type = #tpu.core_type<tc>, window_params = [{transform_indices = @transform_0, window_bounds = array<i64: 2, 256>}, {pipeline_mode = #tpu.pipeline_mode<synchronous>, transform_indices = @transform_1, window_bounds = array<i64: 32, 2>}, {pipeline_mode = #tpu.pipeline_mode<synchronous>, transform_indices = @transform_2, window_bounds = array<i64: 32, 1>}, {pipeline_mode = #tpu.pipeline_mode<synchronous>, transform_indices = @transform_3, window_bounds = array<i64: 1, 32>}, {pipeline_mode = #tpu.pipeline_mode<synchronous>, transform_indices = @transform_4, window_bounds = array<i64: 1, 1>}, {pipeline_mode = #tpu.pipeline_mode<synchronous>, transform_indices = @transform_5, window_bounds = array<i64: 2, 32, 32>}, {pipeline_mode = #tpu.pipeline_mode<synchronous>, transform_indices = @transform_6, window_bounds = array<i64: 2, 32, 1>}, {transform_indices = @transform_7, window_bounds = array<i64: 1, 1, 256>}]} {
    %c0 = arith.constant 0 : index
    %c0_0 = arith.constant 0 : index
    %0 = vector.load %arg1[%c0, %c0_0] : memref<2x256xf32, #tpu.memory_space<vmem>>, vector<2x256xf32>
    %c0_1 = arith.constant 0 : index
    %c0_2 = arith.constant 0 : index
    %1 = vector.load %arg2[%c0_1, %c0_2] : memref<32x2xf32, #tpu.memory_space<vmem>>, vector<32x2xf32>
    %2 = vector.extract_strided_slice %1 {offsets = [0, 0], sizes = [32, 1], strides = [1, 1]} : vector<32x2xf32> to vector<32x1xf32>
    %3 = vector.extract_strided_slice %0 {offsets = [0, 0], sizes = [1, 256], strides = [1, 1]} : vector<2x256xf32> to vector<1x256xf32>
    %4 = vector.broadcast %2 : vector<32x1xf32> to vector<32x256xf32>
    %5 = vector.broadcast %3 : vector<1x256xf32> to vector<32x256xf32>
    %6 = arith.mulf %4, %5 : vector<32x256xf32>
    %7 = vector.extract_strided_slice %1 {offsets = [0, 1], sizes = [32, 1], strides = [1, 1]} : vector<32x2xf32> to vector<32x1xf32>
    %8 = vector.extract_strided_slice %0 {offsets = [1, 0], sizes = [1, 256], strides = [1, 1]} : vector<2x256xf32> to vector<1x256xf32>
    %9 = vector.broadcast %7 : vector<32x1xf32> to vector<32x256xf32>
    %10 = vector.broadcast %8 : vector<1x256xf32> to vector<32x256xf32>
    %11 = arith.mulf %9, %10 : vector<32x256xf32>
    %12 = arith.addf %6, %11 : vector<32x256xf32>
    %c0_3 = arith.constant 0 : index
    %c0_4 = arith.constant 0 : index
    %13 = vector.load %arg3[%c0_3, %c0_4] : memref<32x1xf32, #tpu.memory_space<vmem>>, vector<32x1xf32>
    %14 = vector.broadcast %13 : vector<32x1xf32> to vector<32x256xf32>
    %15 = arith.addf %12, %14 : vector<32x256xf32>
    %16 = math.tanh %15 : vector<32x256xf32>
    %c0_5 = arith.constant 0 : index
    %c0_6 = arith.constant 0 : index
    %c0_7 = arith.constant 0 : index
    %17 = vector.load %arg6[%c0_5, %c0_6, %c0_7] : memref<2x32x32xf32, #tpu.memory_space<vmem>>, vector<1x32x32xf32>
    %18 = vector.shape_cast %17 : vector<1x32x32xf32> to vector<32x32xf32>
    %cst = arith.constant dense<0.000000e+00> : vector<32x256xf32>
    %19 = tpu.matmul %18, %16, %cst {dimension_numbers = #tpu.dot_dimension_numbers<[1], [0], [0], [1], [0, 0, 1, 1], [], []>} : vector<32x32xf32>, vector<32x256xf32>, vector<32x256xf32> -> vector<32x256xf32>
    %c0_8 = arith.constant 0 : index
    %c0_9 = arith.constant 0 : index
    %c0_10 = arith.constant 0 : index
    %20 = vector.load %arg7[%c0_8, %c0_9, %c0_10] : memref<2x32x1xf32, #tpu.memory_space<vmem>>, vector<1x32x1xf32>
    %21 = vector.shape_cast %20 : vector<1x32x1xf32> to vector<32x1xf32>
    %22 = vector.broadcast %21 : vector<32x1xf32> to vector<32x256xf32>
    %23 = arith.addf %19, %22 : vector<32x256xf32>
    %24 = math.tanh %23 : vector<32x256xf32>
    %c1 = arith.constant 1 : index
    %c0_11 = arith.constant 0 : index
    %c0_12 = arith.constant 0 : index
    %25 = vector.load %arg6[%c1, %c0_11, %c0_12] : memref<2x32x32xf32, #tpu.memory_space<vmem>>, vector<1x32x32xf32>
    %26 = vector.shape_cast %25 : vector<1x32x32xf32> to vector<32x32xf32>
    %cst_13 = arith.constant dense<0.000000e+00> : vector<32x256xf32>
    %27 = tpu.matmul %26, %24, %cst_13 {dimension_numbers = #tpu.dot_dimension_numbers<[1], [0], [0], [1], [0, 0, 1, 1], [], []>} : vector<32x32xf32>, vector<32x256xf32>, vector<32x256xf32> -> vector<32x256xf32>
    %c1_14 = arith.constant 1 : index
    %c0_15 = arith.constant 0 : index
    %c0_16 = arith.constant 0 : index
    %28 = vector.load %arg7[%c1_14, %c0_15, %c0_16] : memref<2x32x1xf32, #tpu.memory_space<vmem>>, vector<1x32x1xf32>
    %29 = vector.shape_cast %28 : vector<1x32x1xf32> to vector<32x1xf32>
    %30 = vector.broadcast %29 : vector<32x1xf32> to vector<32x256xf32>
    %31 = arith.addf %27, %30 : vector<32x256xf32>
    %32 = math.tanh %31 : vector<32x256xf32>
    %c0_17 = arith.constant 0 : index
    %c0_18 = arith.constant 0 : index
    %33 = vector.load %arg4[%c0_17, %c0_18] : memref<1x32xf32, #tpu.memory_space<vmem>>, vector<1x32xf32>
    %cst_19 = arith.constant dense<0.000000e+00> : vector<1x256xf32>
    %34 = tpu.matmul %33, %32, %cst_19 {dimension_numbers = #tpu.dot_dimension_numbers<[1], [0], [0], [1], [0, 0, 1, 1], [], []>} : vector<1x32xf32>, vector<32x256xf32>, vector<1x256xf32> -> vector<1x256xf32>
    %c0_20 = arith.constant 0 : index
    %c0_21 = arith.constant 0 : index
    %35 = vector.load %arg5[%c0_20, %c0_21] : memref<1x1xf32, #tpu.memory_space<vmem>>, vector<1x1xf32>
    %36 = vector.broadcast %35 : vector<1x1xf32> to vector<1x256xf32>
    %37 = arith.addf %34, %36 : vector<1x256xf32>
    %38 = math.tanh %37 : vector<1x256xf32>
    %39 = vector.shape_cast %38 : vector<1x256xf32> to vector<1x1x256xf32>
    %c0_22 = arith.constant 0 : index
    %c0_23 = arith.constant 0 : index
    %c0_24 = arith.constant 0 : index
    %40 = vector.load %arg8[%c0_22, %c0_23, %c0_24] : memref<1x1x256xf32, #tpu.memory_space<vmem>>, vector<1x1x256xf32>
    tpu.vector_store %arg8[%c0_22, %c0_23, %c0_24], %39 {strides = array<i32>} : memref<1x1x256xf32, #tpu.memory_space<vmem>>, vector<1x1x256xf32>,
    return
  }
  func.func @transform_0(%arg0: i32) -> (i32, i32) {
    %c0_i32 = arith.constant 0 : i32
    %c0_i32_0 = arith.constant 0 : i32
    return %c0_i32, %arg0 : i32, i32
  }
  func.func @transform_1(%arg0: i32) -> (i32, i32) {
    %c0_i32 = arith.constant 0 : i32
    %c0_i32_0 = arith.constant 0 : i32
    %c0_i32_1 = arith.constant 0 : i32
    return %c0_i32, %c0_i32_0 : i32, i32
  }
  func.func @transform_2(%arg0: i32) -> (i32, i32) {
    %c0_i32 = arith.constant 0 : i32
    %c0_i32_0 = arith.constant 0 : i32
    %c0_i32_1 = arith.constant 0 : i32
    return %c0_i32, %c0_i32_0 : i32, i32
  }
  func.func @transform_3(%arg0: i32) -> (i32, i32) {
    %c0_i32 = arith.constant 0 : i32
    %c0_i32_0 = arith.constant 0 : i32
    %c0_i32_1 = arith.constant 0 : i32
    return %c0_i32, %c0_i32_0 : i32, i32
  }
  func.func @transform_4(%arg0: i32) -> (i32, i32) {
    %c0_i32 = arith.constant 0 : i32
    %c0_i32_0 = arith.constant 0 : i32
    %c0_i32_1 = arith.constant 0 : i32
    return %c0_i32, %c0_i32_0 : i32, i32
  }
  func.func @transform_5(%arg0: i32) -> (i32, i32, i32) {
    %c0_i32 = arith.constant 0 : i32
    %c0_i32_0 = arith.constant 0 : i32
    %c0_i32_1 = arith.constant 0 : i32
    %c0_i32_2 = arith.constant 0 : i32
    return %c0_i32, %c0_i32_0, %c0_i32_1 : i32, i32, i32
  }
  func.func @transform_6(%arg0: i32) -> (i32, i32, i32) {
    %c0_i32 = arith.constant 0 : i32
    %c0_i32_0 = arith.constant 0 : i32
    %c0_i32_1 = arith.constant 0 : i32
    %c0_i32_2 = arith.constant 0 : i32
    return %c0_i32, %c0_i32_0, %c0_i32_1 : i32, i32, i32
  }
  func.func @transform_7(%arg0: i32) -> (i32, i32, i32) {
    %c0_i32 = arith.constant 0 : i32
    %c0_i32_0 = arith.constant 0 : i32
    %c0_i32_1 = arith.constant 0 : i32
    return %arg0, %c0_i32, %c0_i32_0 : i32, i32, i32
  }
}

</mosaic_0001>

<llo_original>
// kernel: tpu_custom_call.1
$region0: #{tpu_custom_call.1}
  #allocation0 [shape = 'u32[]', space=smem, size = 0x4, offset = 0x4, fixed_abs, tag = 'smem constant byte address 0x4 - core index']
  #allocation1 [shape = 'u32[72,128]{1,0:T(1,128)}', space=vmem, size = 0x9000, scoped, tag = 'internal scratch']
  #allocation2 [shape = 'f32[1,1]{1,0:T(1,128)S(1)}', space=vmem, size = 0x200, scoped, tag = 'scoped memory for tpu_custom_call.1']
  %s0 = inlined_call_operand.vmem [shape: f32[2,512], index: 0, kind: input, shape index: {}]
  %s1 = inlined_call_operand.vmem [shape: f32[32,2], index: 1, kind: input, shape index: {}]
  %s2 = inlined_call_operand.vmem [shape: f32[32,1], index: 2, kind: input, shape index: {}]
  %s3 = inlined_call_operand.vmem [shape: f32[1,32], index: 3, kind: input, shape index: {}]
  %s4 = inlined_call_operand.<no memory space> [shape: f32[1,1], index: 4, kind: input, shape index: {}]
  %s5 = inlined_call_operand.vmem [shape: f32[2,32,32], index: 5, kind: input, shape index: {}]
  %s6 = inlined_call_operand.vmem [shape: f32[2,32,1], index: 6, kind: input, shape index: {}]
  %s7 = inlined_call_operand.hbm [shape: f32[2,1,256], index: 7, kind: output, shape index: {}]
  %s8 = sld [smem:[#allocation0]]
  $region61: #{tpu_custom_call.1} parent=0
    _
  %s10 = ssub.s32 1, %s8
  %s11 = scalar_select 0, %s10, %s8
  %v12 = vstv %s4
  %13 = vst [vmem:[#allocation2] sm:$0x1] %v12
  $region1: #{tpu_custom_call.1} parent=0
    #allocation3 [shape = 'u8[2048]{0}', space=vmem, size = 0x800, scoped, tag = 'output window, operand 0']
    #allocation4 [shape = 's32[2]{0}', space=sflag, size = 0x8, scoped, tag = 'scoped memory for tpu_custom_call.1']
    %14 = vsyncpa [#allocation4], 0
    %s15 = scalar_lea.sflag [#allocation4], 1
    %16 = vsyncpa %s15, 0
    loop: start=0, step=1, limit=4
    $region2: #{tpu_custom_call.1} parent=1 // loop_pre_header
      _
    $region3: #{tpu_custom_call.1} parent=1 // loop_header
      %s18 = sphi 0, %s22
      %p19 = scmp.ge.s32.totalorder %s18, 4
      %s28 = sphi 0, %s30
      %s31 = sphi 0, %s28
      %s32 = sphi 0, %s31
      %s48 = sphi 0, %s32
      %s52 = sphi 0, %s52
      %s54 = sphi 0, %s52
      %s55 = sphi 0, %s54
      %s69 = sphi 0, %s55
      %s73 = sphi 0, %s73
      %s75 = sphi 0, %s73
      %s76 = sphi 0, %s75
      %s90 = sphi 0, %s76
      %s94 = sphi 0, %s94
      %s96 = sphi 0, %s94
      %s97 = sphi 0, %s96
      %s111 = sphi 0, %s97
      %s115 = sphi 0, %s115
      %s117 = sphi 0, %s115
      %s118 = sphi 0, %s117
      %s132 = sphi 0, %s118
      %s136 = sphi 0, %s136
      %s138 = sphi 0, %s136
      %s139 = sphi 0, %s138
      %s153 = sphi 0, %s139
      %s157 = sphi 0, %s157
      %s159 = sphi 0, %s157
      %s160 = sphi 0, %s159
      %s174 = sphi 0, %s160
      %s180 = sphi 0, %s182
      %s183 = sphi 0, %s180
      %s184 = sphi 0, %s183
      %s200 = sphi 0, %s184
    $region4: #{tpu_custom_call.1} parent=1 // loop_header_branch
      %21 = sbr.rel (%p19) target = $region8
    $region5: #{tpu_custom_call.1} parent=1 // loop_body
      %s23 = ssub.s32 %s18, 1
      %s24 = ssub.s32 %s18, 2
      %s25 = sadd.s32 %s18, 1
      %s26 = ssub.s32 %s18, %s25
      %p27 = scmp.eq.s32.totalorder %s26, 0
      %s29 = sadd.s32 %s28, 1
      %s30 = scalar_select %p27, %s28, %s29
      %p33 = pneg %p27
      %p34 = scmp.eq.s32.totalorder %s18, 1
      %p35 = por %p33, %p34
      %p36 = scmp.ne.s32.totalorder %s28, %s31
      %p37 = scmp.eq.s32.totalorder %s18, 0
      %p38 = por %p36, %p37
      %p39 = scmp.ne.s32.totalorder %s28, %s31
      %p40 = scmp.eq.s32.totalorder %s23, 1
      %p41 = por %p39, %p40
      %p42 = scmp.ne.s32.totalorder %s31, %s32
      %p43 = scmp.eq.s32.totalorder %s23, 0
      %p44 = por %p42, %p43
      %p45 = scmp.ne.s32.totalorder %s31, %s32
      %p46 = scmp.eq.s32.totalorder %s24, 1
      %p47 = por %p45, %p46
      %p49 = scmp.ne.s32.totalorder %s32, %s48
      %p50 = scmp.eq.s32.totalorder %s24, 0
      %p51 = por %p49, %p50
      %s53 = sadd.s32 %s52, 1
      %p56 = scmp.eq.s32.totalorder %s18, 1
      %p57 = scmp.ne.s32.totalorder %s52, %s54
      %p58 = scmp.eq.s32.totalorder %s18, 0
      %p59 = por %p57, %p58
      %p60 = scmp.ne.s32.totalorder %s52, %s54
      %p61 = scmp.eq.s32.totalorder %s23, 1
      %p62 = por %p60, %p61
      %p63 = scmp.ne.s32.totalorder %s54, %s55
      %p64 = scmp.eq.s32.totalorder %s23, 0
      %p65 = por %p63, %p64
      %p66 = scmp.ne.s32.totalorder %s54, %s55
      %p67 = scmp.eq.s32.totalorder %s24, 1
      %p68 = por %p66, %p67
      %p70 = scmp.ne.s32.totalorder %s55, %s69
      %p71 = scmp.eq.s32.totalorder %s24, 0
      %p72 = por %p70, %p71
      %s74 = sadd.s32 %s73, 1
      %p77 = scmp.eq.s32.totalorder %s18, 1
      %p78 = scmp.ne.s32.totalorder %s73, %s75
      %p79 = scmp.eq.s32.totalorder %s18, 0
      %p80 = por %p78, %p79
      %p81 = scmp.ne.s32.totalorder %s73, %s75
      %p82 = scmp.eq.s32.totalorder %s23, 1
      %p83 = por %p81, %p82
      %p84 = scmp.ne.s32.totalorder %s75, %s76
      %p85 = scmp.eq.s32.totalorder %s23, 0
      %p86 = por %p84, %p85
      %p87 = scmp.ne.s32.totalorder %s75, %s76
      %p88 = scmp.eq.s32.totalorder %s24, 1
      %p89 = por %p87, %p88
      %p91 = scmp.ne.s32.totalorder %s76, %s90
      %p92 = scmp.eq.s32.totalorder %s24, 0
      %p93 = por %p91, %p92
      %s95 = sadd.s32 %s94, 1
      %p98 = scmp.eq.s32.totalorder %s18, 1
      %p99 = scmp.ne.s32.totalorder %s94, %s96
      %p100 = scmp.eq.s32.totalorder %s18, 0
      %p101 = por %p99, %p100
      %p102 = scmp.ne.s32.totalorder %s94, %s96
      %p103 = scmp.eq.s32.totalorder %s23, 1
      %p104 = por %p102, %p103
      %p105 = scmp.ne.s32.totalorder %s96, %s97
      %p106 = scmp.eq.s32.totalorder %s23, 0
      %p107 = por %p105, %p106
      %p108 = scmp.ne.s32.totalorder %s96, %s97
      %p109 = scmp.eq.s32.totalorder %s24, 1
      %p110 = por %p108, %p109
      %p112 = scmp.ne.s32.totalorder %s97, %s111
      %p113 = scmp.eq.s32.totalorder %s24, 0
      %p114 = por %p112, %p113
      %s116 = sadd.s32 %s115, 1
      %p119 = scmp.eq.s32.totalorder %s18, 1
      %p120 = scmp.ne.s32.totalorder %s115, %s117
      %p121 = scmp.eq.s32.totalorder %s18, 0
      %p122 = por %p120, %p121
      %p123 = scmp.ne.s32.totalorder %s115, %s117
      %p124 = scmp.eq.s32.totalorder %s23, 1
      %p125 = por %p123, %p124
      %p126 = scmp.ne.s32.totalorder %s117, %s118
      %p127 = scmp.eq.s32.totalorder %s23, 0
      %p128 = por %p126, %p127
      %p129 = scmp.ne.s32.totalorder %s117, %s118
      %p130 = scmp.eq.s32.totalorder %s24, 1
      %p131 = por %p129, %p130
      %p133 = scmp.ne.s32.totalorder %s118, %s132
      %p134 = scmp.eq.s32.totalorder %s24, 0
      %p135 = por %p133, %p134
      %s137 = sadd.s32 %s136, 1
      %p140 = scmp.eq.s32.totalorder %s18, 1
      %p141 = scmp.ne.s32.totalorder %s136, %s138
      %p142 = scmp.eq.s32.totalorder %s18, 0
      %p143 = por %p141, %p142
      %p144 = scmp.ne.s32.totalorder %s136, %s138
      %p145 = scmp.eq.s32.totalorder %s23, 1
      %p146 = por %p144, %p145
      %p147 = scmp.ne.s32.totalorder %s138, %s139
      %p148 = scmp.eq.s32.totalorder %s23, 0
      %p149 = por %p147, %p148
      %p150 = scmp.ne.s32.totalorder %s138, %s139
      %p151 = scmp.eq.s32.totalorder %s24, 1
      %p152 = por %p150, %p151
      %p154 = scmp.ne.s32.totalorder %s139, %s153
      %p155 = scmp.eq.s32.totalorder %s24, 0
      %p156 = por %p154, %p155
      %s158 = sadd.s32 %s157, 1
      %p161 = scmp.eq.s32.totalorder %s18, 1
      %p162 = scmp.ne.s32.totalorder %s157, %s159
      %p163 = scmp.eq.s32.totalorder %s18, 0
      %p164 = por %p162, %p163
      %p165 = scmp.ne.s32.totalorder %s157, %s159
      %p166 = scmp.eq.s32.totalorder %s23, 1
      %p167 = por %p165, %p166
      %p168 = scmp.ne.s32.totalorder %s159, %s160
      %p169 = scmp.eq.s32.totalorder %s23, 0
      %p170 = por %p168, %p169
      %p171 = scmp.ne.s32.totalorder %s159, %s160
      %p172 = scmp.eq.s32.totalorder %s24, 1
      %p173 = por %p171, %p172
      %p175 = scmp.ne.s32.totalorder %s160, %s174
      %p176 = scmp.eq.s32.totalorder %s24, 0
      %p177 = por %p175, %p176
      %s178 = ssub.s32 %s18, %s25
      %p179 = scmp.eq.s32.totalorder %s178, 0
      %s181 = sadd.s32 %s180, 1
      %s182 = scalar_select %p179, %s180, %s181
      %p185 = pneg %p179
      %p186 = scmp.eq.s32.totalorder %s18, 1
      %p187 = por %p185, %p186
      %p188 = scmp.ne.s32.totalorder %s180, %s183
      %p189 = scmp.eq.s32.totalorder %s18, 0
      %p190 = por %p188, %p189
      %p191 = scmp.ne.s32.totalorder %s180, %s183
      %p192 = scmp.eq.s32.totalorder %s23, 1
      %p193 = por %p191, %p192
      %p194 = scmp.ne.s32.totalorder %s183, %s184
      %p195 = scmp.eq.s32.totalorder %s23, 0
      %p196 = por %p194, %p195
      %p197 = scmp.ne.s32.totalorder %s183, %s184
      %p198 = scmp.eq.s32.totalorder %s24, 1
      %p199 = por %p197, %p198
      %p201 = scmp.ne.s32.totalorder %s184, %s200
      %p202 = scmp.eq.s32.totalorder %s24, 0
      %p203 = por %p201, %p202
      %p204 = scmp.le.s32.totalorder 1, %s18
      %p205 = scmp.lt.s32.totalorder %s18, 3
      %p206 = pnand %p204, %p205
      %p207 = pneg %p206
      // Predicated region
      $region9: #{tpu_custom_call.1} parent=5 // pred_check
        _
      $region10: #{tpu_custom_call.1} parent=5 // pred_check_branch
        %209 = sbr.rel (%p206) target = $region12
      $region11: #{tpu_custom_call.1} parent=5 // pred_region
        %s210 = ssub.s32 %s18, 1
        // Predicated region
        $region13: #{tpu_custom_call.1} parent=11 // pred_check
          %p211 = pneg %p65
        $region14: #{tpu_custom_call.1} parent=11 // pred_check_branch
          %213 = sbr.rel (%p211) target = $region16
        $region15: #{tpu_custom_call.1} parent=11 // pred_region
          _
        $region16: #{tpu_custom_call.1} parent=11 // pred_fallthru
          _
        // Predicated region
        $region17: #{tpu_custom_call.1} parent=11 // pred_check
          %p214 = pneg %p86
        $region18: #{tpu_custom_call.1} parent=11 // pred_check_branch
          %216 = sbr.rel (%p214) target = $region20
        $region19: #{tpu_custom_call.1} parent=11 // pred_region
          _
        $region20: #{tpu_custom_call.1} parent=11 // pred_fallthru
          _
        // Predicated region
        $region21: #{tpu_custom_call.1} parent=11 // pred_check
          %p217 = pneg %p107
        $region22: #{tpu_custom_call.1} parent=11 // pred_check_branch
          %219 = sbr.rel (%p217) target = $region24
        $region23: #{tpu_custom_call.1} parent=11 // pred_region
          _
        $region24: #{tpu_custom_call.1} parent=11 // pred_fallthru
          _
        // Predicated region
        $region25: #{tpu_custom_call.1} parent=11 // pred_check
          %p220 = pneg %p128
        $region26: #{tpu_custom_call.1} parent=11 // pred_check_branch
          %222 = sbr.rel (%p220) target = $region28
        $region27: #{tpu_custom_call.1} parent=11 // pred_region
          _
        $region28: #{tpu_custom_call.1} parent=11 // pred_fallthru
          _
        // Predicated region
        $region29: #{tpu_custom_call.1} parent=11 // pred_check
          %p223 = pneg %p149
        $region30: #{tpu_custom_call.1} parent=11 // pred_check_branch
          %225 = sbr.rel (%p223) target = $region32
        $region31: #{tpu_custom_call.1} parent=11 // pred_region
          _
        $region32: #{tpu_custom_call.1} parent=11 // pred_fallthru
          _
        // Predicated region
        $region33: #{tpu_custom_call.1} parent=11 // pred_check
          %p226 = pneg %p170
        $region34: #{tpu_custom_call.1} parent=11 // pred_check_branch
          %228 = sbr.rel (%p226) target = $region36
        $region35: #{tpu_custom_call.1} parent=11 // pred_region
          _
        $region36: #{tpu_custom_call.1} parent=11 // pred_fallthru
          _
      $region12: #{tpu_custom_call.1} parent=5 // pred_fallthru
        _
      %p229 = scmp.lt.s32.totalorder %s18, 2
      // Predicated region
      $region37: #{tpu_custom_call.1} parent=5 // pred_check
        %p230 = pneg %p229
      $region38: #{tpu_custom_call.1} parent=5 // pred_check_branch
        %232 = sbr.rel (%p230) target = $region40
      $region39: #{tpu_custom_call.1} parent=5 // pred_region
        // Predicated region
        $region41: #{tpu_custom_call.1} parent=39 // pred_check
          %p233 = pneg %p38
        $region42: #{tpu_custom_call.1} parent=39 // pred_check_branch
          %235 = sbr.rel (%p233) target = $region44
        $region43: #{tpu_custom_call.1} parent=39 // pred_region
          %s236 = smul.u32 2, %s18
          %p237 = scmp.lt.s32.totalorder %s236, 3
          %s238 = scalar_select %p237, %s236, 3
          %s239 = smul.addr %s238, 2
          %s240 = scalar_lea.vmem %s0, %s239
          %s241 = smul.u32 2, %s18
        $region44: #{tpu_custom_call.1} parent=39 // pred_fallthru
          _
      $region40: #{tpu_custom_call.1} parent=5 // pred_fallthru
        _
      %p242 = scmp.le.s32.totalorder 1, %s18
      %p243 = scmp.lt.s32.totalorder %s18, 3
      %p244 = pnand %p242, %p243
      %p245 = pneg %p244
      // Predicated region
      $region45: #{tpu_custom_call.1} parent=5 // pred_check
        _
      $region46: #{tpu_custom_call.1} parent=5 // pred_check_branch
        %247 = sbr.rel (%p244) target = $region48
      $region47: #{tpu_custom_call.1} parent=5 // pred_region
        %s248 = ssub.s32 %s18, 1
        %s249 = smul.u32 2, %s23
        %p250 = scmp.lt.s32.totalorder %s249, 3
        %s251 = scalar_select %p250, %s249, 3
        %s252 = smul.addr %s251, 2
        %s253 = scalar_lea.vmem %s0, %s252
        %p254 = pneg %p44
        %p255 = pneg %p41
        %p256 = pneg %p65
        %p257 = pneg %p62
        %p258 = pneg %p86
        %p259 = pneg %p83
        %p260 = pneg %p107
        %p261 = pneg %p104
        %p262 = pneg %p128
        %p263 = pneg %p125
        %p264 = pneg %p149
        %p265 = pneg %p146
        %p266 = pneg %p170
        %p267 = pneg %p167
        %p268 = pneg %p196
        %p269 = pneg %p193
        %s270 = sand.u32 %s183, 1
        %s271 = scalar_lea.sflag [#allocation4], %s270
        %s272 = sand.u32 %s183, 1
        %s273 = smul.addr %s272, 2
        %s274 = scalar_lea.vmem [#allocation3], %s273
        %s275 = smul.u32 2, %s23
        %p276 = scmp.lt.s32.totalorder %s275, 3
        %s277 = scalar_select %p276, %s275, 3
        %s278 = smul.addr %s277, 2
        %s279 = scalar_lea.vmem %s0, %s278
        %s280 = smul.u32 2, %s23
        %v281 = vld [vmem:[%s279] sm:$0xf]
        %v282 = vld [vmem:[%s1] sm:$0xff]
        %v283 = vld [vmem:[%s1 + $0x8] sm:$0xff]
        %v284 = vld [vmem:[%s1 + $0x10] sm:$0xff]
        %v285 = vld [vmem:[%s1 + $0x18] sm:$0xff]
        %287 = vset.pattern.permute.xlu0 0
        %288 = vperm.xlu0 %287, %v282
        %v289 = vpop.permute.xlu0 %288
        %292 = vset.pattern.permute.xlu0 0
        %293 = vperm.xlu0 %292, %v283
        %v294 = vpop.permute.xlu0 %293
        %297 = vset.pattern.permute.xlu0 0
        %298 = vperm.xlu0 %297, %v284
        %v299 = vpop.permute.xlu0 %298
        %302 = vset.pattern.permute.xlu0 0
        %303 = vperm.xlu0 %302, %v285
        %v304 = vpop.permute.xlu0 %303
        %v307 = vperm.slane %v281, 0
        %v308 = vperm.slane %v281, 2
        %v311 = vperm.slane %v307, 0
        %v312 = vperm.slane %v308, 0
        %v313 = vmul.f32 %v289, %v311
        %v314 = vmul.f32 %v289, %v312
        %v315 = vmul.f32 %v294, %v311
        %v316 = vmul.f32 %v294, %v312
        %v317 = vmul.f32 %v299, %v311
        %v318 = vmul.f32 %v299, %v312
        %v319 = vmul.f32 %v304, %v311
        %v320 = vmul.f32 %v304, %v312
        %321 = vset.pattern.permute.xlu0 1
        %322 = vperm.xlu0 %321, %v282
        %v323 = vpop.permute.xlu0 %322
        %325 = vset.pattern.permute.xlu0 1
        %326 = vperm.xlu0 %325, %v283
        %v327 = vpop.permute.xlu0 %326
        %329 = vset.pattern.permute.xlu0 1
        %330 = vperm.xlu0 %329, %v284
        %v331 = vpop.permute.xlu0 %330
        %333 = vset.pattern.permute.xlu0 1
        %334 = vperm.xlu0 %333, %v285
        %v335 = vpop.permute.xlu0 %334
        %v337 = vperm.slane %v281, 1
        %v338 = vperm.slane %v281, 3
        %v341 = vperm.slane %v337, 1
        %v342 = vperm.slane %v338, 1
        %v343 = vmul.f32 %v323, %v341
        %v344 = vmul.f32 %v323, %v342
        %v345 = vmul.f32 %v327, %v341
        %v346 = vmul.f32 %v327, %v342
        %v347 = vmul.f32 %v331, %v341
        %v348 = vmul.f32 %v331, %v342
        %v349 = vmul.f32 %v335, %v341
        %v350 = vmul.f32 %v335, %v342
        %v351 = vadd.f32 %v313, %v343
        %v352 = vadd.f32 %v314, %v344
        %v353 = vadd.f32 %v315, %v345
        %v354 = vadd.f32 %v316, %v346
        %v355 = vadd.f32 %v317, %v347
        %v356 = vadd.f32 %v318, %v348
        %v357 = vadd.f32 %v319, %v349
        %v358 = vadd.f32 %v320, %v350
        %v359 = vld [vmem:[%s2] sm:$0xff]
        %v360 = vld [vmem:[%s2 + $0x8] sm:$0xff]
        %v361 = vld [vmem:[%s2 + $0x10] sm:$0xff]
        %v362 = vld [vmem:[%s2 + $0x18] sm:$0xff]
        %364 = vset.pattern.permute.xlu0 0
        %365 = vperm.xlu0 %364, %v359
        %v366 = vpop.permute.xlu0 %365
        %369 = vset.pattern.permute.xlu0 0
        %370 = vperm.xlu0 %369, %v360
        %v371 = vpop.permute.xlu0 %370
        %374 = vset.pattern.permute.xlu0 0
        %375 = vperm.xlu0 %374, %v361
        %v376 = vpop.permute.xlu0 %375
        %379 = vset.pattern.permute.xlu0 0
        %380 = vperm.xlu0 %379, %v362
        %v381 = vpop.permute.xlu0 %380
        %v383 = vadd.f32 %v351, %v366
        %v384 = vadd.f32 %v352, %v366
        %v385 = vadd.f32 %v353, %v371
        %v386 = vadd.f32 %v354, %v371
        %v387 = vadd.f32 %v355, %v376
        %v388 = vadd.f32 %v356, %v376
        %v389 = vadd.f32 %v357, %v381
        %v390 = vadd.f32 %v358, %v381
        %v391 = vtanh.pop %v383
        %v392 = vtanh.pop %v384
        %v393 = vtanh.pop %v385
        %v394 = vtanh.pop %v386
        %v395 = vtanh.pop %v387
        %v396 = vtanh.pop %v388
        %v397 = vtanh.pop %v389
        %v398 = vtanh.pop %v390
        %v399 = vld [vmem:[%s5] sm:$0xff]
        %v400 = vld [vmem:[%s5 + $0x8] sm:$0xff]
        %v401 = vld [vmem:[%s5 + $0x10] sm:$0xff]
        %v402 = vld [vmem:[%s5 + $0x18] sm:$0xff]
        %v403 = vld [vmem:[%s6] sm:$0xff]
        %v404 = vld [vmem:[%s6 + $0x8] sm:$0xff]
        %v405 = vld [vmem:[%s6 + $0x10] sm:$0xff]
        %v406 = vld [vmem:[%s6 + $0x18] sm:$0xff]
        %408 = vset.pattern.permute.xlu0 0
        %409 = vperm.xlu0 %408, %v403
        %v410 = vpop.permute.xlu0 %409
        %413 = vset.pattern.permute.xlu0 0
        %414 = vperm.xlu0 %413, %v404
        %v415 = vpop.permute.xlu0 %414
        %418 = vset.pattern.permute.xlu0 0
        %419 = vperm.xlu0 %418, %v405
        %v420 = vpop.permute.xlu0 %419
        %423 = vset.pattern.permute.xlu0 0
        %424 = vperm.xlu0 %423, %v406
        %v425 = vpop.permute.xlu0 %424
        %vm427 = vcmask 261120
        %v429 = vsel %vm427, %v399, 0
        %v432 = vsel %vm427, %v400, 0
        %v435 = vsel %vm427, %v401, 0
        %v438 = vsel %vm427, %v402, 0
        %440 = vmatpush.msra.mxu0 0.0
        %441 = vmatpush.msra.mxu0 0.0
        %442 = vmatpush.msra.mxu0 0.0
        %443 = vmatpush.msra.mxu0 0.0
        %444 = vmatpush.msra.mxu0 0.0
        %445 = vmatpush.msra.mxu0 0.0
        %446 = vmatpush.msra.mxu0 0.0
        %447 = vmatpush.msra.mxu0 0.0
        %448 = vmatpush.msra.mxu0 0.0
        %449 = vmatpush.msra.mxu0 0.0
        %450 = vmatpush.msra.mxu0 0.0
        %451 = vmatpush.msra.mxu0 0.0
        %452 = vmatpush.msra.mxu0 %v397
        %453 = vmatpush.msra.mxu0 %v395
        %454 = vmatpush.msra.mxu0 %v393
        %455 = vmatpush.msra.mxu0 %v391
        %456 = vmatmul.f32.gmra.mxu0 %v429
        %v457 = vpop.f32.mrf.mxu0
        %v458 = vadd.f32 %v410, %v457
        %459 = vmatmul.f32.gmra.mxu0 %v432
        %v460 = vpop.f32.mrf.mxu0
        %v461 = vadd.f32 %v415, %v460
        %462 = vmatmul.f32.gmra.mxu0 %v435
        %v463 = vpop.f32.mrf.mxu0
        %v464 = vadd.f32 %v420, %v463
        %465 = vmatmul.f32.gmra.mxu0 %v438
        %v466 = vpop.f32.mrf.mxu0
        %v467 = vadd.f32 %v425, %v466
        %468 = vdwg.mxu0
        %469 = vmatpush.msra.mxu0 0.0
        %470 = vmatpush.msra.mxu0 0.0
        %471 = vmatpush.msra.mxu0 0.0
        %472 = vmatpush.msra.mxu0 0.0
        %473 = vmatpush.msra.mxu0 0.0
        %474 = vmatpush.msra.mxu0 0.0
        %475 = vmatpush.msra.mxu0 0.0
        %476 = vmatpush.msra.mxu0 0.0
        %477 = vmatpush.msra.mxu0 0.0
        %478 = vmatpush.msra.mxu0 0.0
        %479 = vmatpush.msra.mxu0 0.0
        %480 = vmatpush.msra.mxu0 0.0
        %481 = vmatpush.msra.mxu0 %v398
        %482 = vmatpush.msra.mxu0 %v396
        %483 = vmatpush.msra.mxu0 %v394
        %484 = vmatpush.msra.mxu0 %v392
        %485 = vmatmul.f32.gmra.mxu0 %v429
        %v486 = vpop.f32.mrf.mxu0
        %v487 = vadd.f32 %v410, %v486
        %488 = vmatmul.f32.gmra.mxu0 %v432
        %v489 = vpop.f32.mrf.mxu0
        %v490 = vadd.f32 %v415, %v489
        %491 = vmatmul.f32.gmra.mxu0 %v435
        %v492 = vpop.f32.mrf.mxu0
        %v493 = vadd.f32 %v420, %v492
        %494 = vmatmul.f32.gmra.mxu0 %v438
        %v495 = vpop.f32.mrf.mxu0
        %v496 = vadd.f32 %v425, %v495
        %497 = vdwg.mxu0
        %v498 = vtanh.pop %v458
        %v499 = vtanh.pop %v487
        %v500 = vtanh.pop %v461
        %v501 = vtanh.pop %v490
        %v502 = vtanh.pop %v464
        %v503 = vtanh.pop %v493
        %v504 = vtanh.pop %v467
        %v505 = vtanh.pop %v496
        %s506 = scalar_lea.vmem %s5, 32
        %v507 = vld [vmem:[%s506] sm:$0xff]
        %v508 = vld [vmem:[%s506 + $0x8] sm:$0xff]
        %v509 = vld [vmem:[%s506 + $0x10] sm:$0xff]
        %v510 = vld [vmem:[%s506 + $0x18] sm:$0xff]
        %s511 = scalar_lea.vmem %s6, 32
        %v512 = vld [vmem:[%s511] sm:$0xff]
        %v513 = vld [vmem:[%s511 + $0x8] sm:$0xff]
        %v514 = vld [vmem:[%s511 + $0x10] sm:$0xff]
        %v515 = vld [vmem:[%s511 + $0x18] sm:$0xff]
        %517 = vset.pattern.permute.xlu0 0
        %518 = vperm.xlu0 %517, %v512
        %v519 = vpop.permute.xlu0 %518
        %522 = vset.pattern.permute.xlu0 0
        %523 = vperm.xlu0 %522, %v513
        %v524 = vpop.permute.xlu0 %523
        %527 = vset.pattern.permute.xlu0 0
        %528 = vperm.xlu0 %527, %v514
        %v529 = vpop.permute.xlu0 %528
        %532 = vset.pattern.permute.xlu0 0
        %533 = vperm.xlu0 %532, %v515
        %v534 = vpop.permute.xlu0 %533
        %v537 = vsel %vm427, %v507, 0
        %v540 = vsel %vm427, %v508, 0
        %v543 = vsel %vm427, %v509, 0
        %v546 = vsel %vm427, %v510, 0
        %548 = vmatpush.msra.mxu0 0.0
        %549 = vmatpush.msra.mxu0 0.0
        %550 = vmatpush.msra.mxu0 0.0
        %551 = vmatpush.msra.mxu0 0.0
        %552 = vmatpush.msra.mxu0 0.0
        %553 = vmatpush.msra.mxu0 0.0
        %554 = vmatpush.msra.mxu0 0.0
        %555 = vmatpush.msra.mxu0 0.0
        %556 = vmatpush.msra.mxu0 0.0
        %557 = vmatpush.msra.mxu0 0.0
        %558 = vmatpush.msra.mxu0 0.0
        %559 = vmatpush.msra.mxu0 0.0
        %560 = vmatpush.msra.mxu0 %v504
        %561 = vmatpush.msra.mxu0 %v502
        %562 = vmatpush.msra.mxu0 %v500
        %563 = vmatpush.msra.mxu0 %v498
        %564 = vmatmul.f32.gmra.mxu0 %v537
        %v565 = vpop.f32.mrf.mxu0
        %v566 = vadd.f32 %v519, %v565
        %567 = vmatmul.f32.gmra.mxu0 %v540
        %v568 = vpop.f32.mrf.mxu0
        %v569 = vadd.f32 %v524, %v568
        %570 = vmatmul.f32.gmra.mxu0 %v543
        %v571 = vpop.f32.mrf.mxu0
        %v572 = vadd.f32 %v529, %v571
        %573 = vmatmul.f32.gmra.mxu0 %v546
        %v574 = vpop.f32.mrf.mxu0
        %v575 = vadd.f32 %v534, %v574
        %576 = vdwg.mxu0
        %577 = vmatpush.msra.mxu0 0.0
        %578 = vmatpush.msra.mxu0 0.0
        %579 = vmatpush.msra.mxu0 0.0
        %580 = vmatpush.msra.mxu0 0.0
        %581 = vmatpush.msra.mxu0 0.0
        %582 = vmatpush.msra.mxu0 0.0
        %583 = vmatpush.msra.mxu0 0.0
        %584 = vmatpush.msra.mxu0 0.0
        %585 = vmatpush.msra.mxu0 0.0
        %586 = vmatpush.msra.mxu0 0.0
        %587 = vmatpush.msra.mxu0 0.0
        %588 = vmatpush.msra.mxu0 0.0
        %589 = vmatpush.msra.mxu0 %v505
        %590 = vmatpush.msra.mxu0 %v503
        %591 = vmatpush.msra.mxu0 %v501
        %592 = vmatpush.msra.mxu0 %v499
        %593 = vmatmul.f32.gmra.mxu0 %v537
        %v594 = vpop.f32.mrf.mxu0
        %v595 = vadd.f32 %v519, %v594
        %596 = vmatmul.f32.gmra.mxu0 %v540
        %v597 = vpop.f32.mrf.mxu0
        %v598 = vadd.f32 %v524, %v597
        %599 = vmatmul.f32.gmra.mxu0 %v543
        %v600 = vpop.f32.mrf.mxu0
        %v601 = vadd.f32 %v529, %v600
        %602 = vmatmul.f32.gmra.mxu0 %v546
        %v603 = vpop.f32.mrf.mxu0
        %v604 = vadd.f32 %v534, %v603
        %605 = vdwg.mxu0
        %v606 = vtanh.pop %v566
        %v607 = vtanh.pop %v595
        %v608 = vtanh.pop %v569
        %v609 = vtanh.pop %v598
        %v610 = vtanh.pop %v572
        %v611 = vtanh.pop %v601
        %v612 = vtanh.pop %v575
        %v613 = vtanh.pop %v604
        %v614 = vld [vmem:[%s3] sm:$0x1]
        %v615 = vld [vmem:[#allocation2] sm:$0x1]
        %617 = vset.pattern.permute.xlu0 0
        %618 = vperm.xlu0 %617, %v615
        %v619 = vpop.permute.xlu0 %618
        %v621 = vperm.slane %v619, 0
        %v623 = vsel %vm427, %v614, 0
        %625 = vmatpush.msra.mxu0 0.0
        %626 = vmatpush.msra.mxu0 0.0
        %627 = vmatpush.msra.mxu0 0.0
        %628 = vmatpush.msra.mxu0 0.0
        %629 = vmatpush.msra.mxu0 0.0
        %630 = vmatpush.msra.mxu0 0.0
        %631 = vmatpush.msra.mxu0 0.0
        %632 = vmatpush.msra.mxu0 0.0
        %633 = vmatpush.msra.mxu0 0.0
        %634 = vmatpush.msra.mxu0 0.0
        %635 = vmatpush.msra.mxu0 0.0
        %636 = vmatpush.msra.mxu0 0.0
        %637 = vmatpush.msra.mxu0 %v612
        %638 = vmatpush.msra.mxu0 %v610
        %639 = vmatpush.msra.mxu0 %v608
        %640 = vmatpush.msra.mxu0 %v606
        %641 = vmatmul.f32.gmra.mxu0 %v623
        %v642 = vpop.f32.mrf.mxu0
        %v643 = vadd.f32 %v621, %v642
        %644 = vdwg.mxu0
        %645 = vmatpush.msra.mxu0 0.0
        %646 = vmatpush.msra.mxu0 0.0
        %647 = vmatpush.msra.mxu0 0.0
        %648 = vmatpush.msra.mxu0 0.0
        %649 = vmatpush.msra.mxu0 0.0
        %650 = vmatpush.msra.mxu0 0.0
        %651 = vmatpush.msra.mxu0 0.0
        %652 = vmatpush.msra.mxu0 0.0
        %653 = vmatpush.msra.mxu0 0.0
        %654 = vmatpush.msra.mxu0 0.0
        %655 = vmatpush.msra.mxu0 0.0
        %656 = vmatpush.msra.mxu0 0.0
        %657 = vmatpush.msra.mxu0 %v613
        %658 = vmatpush.msra.mxu0 %v611
        %659 = vmatpush.msra.mxu0 %v609
        %660 = vmatpush.msra.mxu0 %v607
        %661 = vmatmul.f32.gmra.mxu0 %v623
        %v662 = vpop.f32.mrf.mxu0
        %v663 = vadd.f32 %v621, %v662
        %664 = vdwg.mxu0
        %v665 = vtanh.pop %v643
        %v666 = vtanh.pop %v663
        %v669 = vrot.slane %v666, 7
        %vm670 = vcmask 1040384
        %v671 = vsel %vm670, %v665, %v669
        %v673 = vlaneseq
        %vm674 = vcmp.ge.s32.totalorder %v673, 0
        %vm675 = vcmp.lt.s32.totalorder %v673, 256
        %vm676 = vmand %vm674, %vm675
        %677 = vst.msk [vmem:[%s274] sm:$0x3] %vm676, %v671
        %s678 = sand.u32 %s183, 1
        %s679 = scalar_lea.sflag [#allocation4], %s678
        %s680 = sand.u32 %s183, 1
        %s681 = smul.addr %s680, 2
        %s682 = scalar_lea.vmem [#allocation3], %s681
        // Predicated region
        $region49: #{tpu_custom_call.1} parent=47 // pred_check
          %p683 = pneg %p193
        $region50: #{tpu_custom_call.1} parent=47 // pred_check_branch
          %685 = sbr.rel (%p683) target = $region52
        $region51: #{tpu_custom_call.1} parent=47 // pred_region
          %687 = vsyncadd %s679, 0
          %s688 = smul.addr %s23, 2
          %s689 = scalar_lea.hbm %s7, %s688
          %s691 = sshll.u32 %s682, 4
          %s692 = int_to_ptr.vmem [resolvable:$true] %s691
          %s693 = sshll.u32 %s689, 4
          %s694 = int_to_ptr.hbm [resolvable:$true] %s693
          %696 = dma.vmem_to_hbm [thread:$0]  %s692, 32, %s694, %s679
        $region52: #{tpu_custom_call.1} parent=47 // pred_fallthru
          _
      $region48: #{tpu_custom_call.1} parent=5 // pred_fallthru
        _
      %p697 = scmp.le.s32.totalorder 2, %s18
      // Predicated region
      $region53: #{tpu_custom_call.1} parent=5 // pred_check
        %p698 = pneg %p697
      $region54: #{tpu_custom_call.1} parent=5 // pred_check_branch
        %700 = sbr.rel (%p698) target = $region56
      $region55: #{tpu_custom_call.1} parent=5 // pred_region
        %s701 = ssub.s32 %s18, 2
        // Predicated region
        $region57: #{tpu_custom_call.1} parent=55 // pred_check
          %p702 = pneg %p199
        $region58: #{tpu_custom_call.1} parent=55 // pred_check_branch
          %704 = sbr.rel (%p702) target = $region60
        $region59: #{tpu_custom_call.1} parent=55 // pred_region
          %s705 = sand.u32 %s184, 1
          %s706 = scalar_lea.sflag [#allocation4], %s705
          %s707 = sand.u32 %s184, 1
          %s708 = smul.addr %s707, 2
          %s709 = scalar_lea.vmem [#allocation3], %s708
          %711 = dma.done %s706, 32
        $region60: #{tpu_custom_call.1} parent=55 // pred_fallthru
          _
      $region56: #{tpu_custom_call.1} parent=5 // pred_fallthru
        _
    $region6: #{tpu_custom_call.1} parent=1 // loop_footer
      %s22 = sadd.s32 1, %s18
    $region7: #{tpu_custom_call.1} parent=1 // loop_footer_branch
      %17 = sbr.rel target = $region3
    $region8: #{tpu_custom_call.1} parent=1 // loop_exit
      _
    %712 = vsyncpa [#allocation4], 1
    %s713 = scalar_lea.sflag [#allocation4], 1
    %714 = vsyncpa %s713, 1

</llo_original>
